<compile_context>
chip_gen: v7x
topology: tpu7x:2x2x1
jax: 0.10.0
libtpu: 0.0.40
codegen_flags: <defaults>
</compile_context>

<pallas_src>
import jax
import jax.numpy as jnp
from jax.experimental import pallas as pl
from jax.experimental.pallas import tpu as pltpu


def _round_up(x, m):
    return ((x + m - 1) // m) * m


def _make_kernel(S, TS, B_pad, D_pad, C_pad):
    masked = (S % TS) != 0  # static: only the last tile needs seq-padding mask

    def kernel(z_ref, w1_ref, b1_ref, w2_ref, b2_ref, w3_ref, b3_ref,
               out_ref, acc_ref):
        pid = pl.program_id(0)

        @pl.when(pid == 0)
        def _():
            acc_ref[...] = jnp.zeros_like(acc_ref)

        # --- linear1 + ReLU on this sequence tile ------------------------
        # Single 2-D MXU matmul with M = TS*B_pad rows (bf16 operands,
        # f32 accumulation) instead of TS tiny batched matmuls.
        z2d = z_ref[...].reshape(TS * B_pad, D_pad)
        h = jnp.dot(z2d, w1_ref[...], preferred_element_type=jnp.float32)
        h = jnp.maximum(h + b1_ref[...], 0.0)            # (TS*B_pad, D_pad) f32
        h = h.reshape(TS, B_pad, D_pad)

        if masked:
            # zero out sequence-padding rows so they don't pollute the mean
            row = pid * TS + jax.lax.broadcasted_iota(
                jnp.int32, (TS, B_pad, D_pad), 0)
            h = jnp.where(row < S, h, 0.0)

        acc_ref[...] += jnp.sum(h, axis=0)               # running sum over S

        # --- finalize: mean, linear_2, linear_3, log_softmax -------------
        @pl.when(pid == pl.num_programs(0) - 1)
        def _():
            m = acc_ref[...] * (1.0 / S)                 # divide by true S
            h2 = jnp.dot(m.astype(w2_ref.dtype), w2_ref[...],
                         preferred_element_type=jnp.float32)
            h2 = jnp.maximum(h2 + b2_ref[...], 0.0)      # (B_pad, D_pad)

            logits = jnp.dot(h2.astype(w3_ref.dtype), w3_ref[...],
                             preferred_element_type=jnp.float32)
            logits = logits + b3_ref[...]                # padded classes ~ -1e30

            # log_softmax over the lane-dense class axis (dim=1).
            mx = jnp.max(logits, axis=1, keepdims=True)
            shifted = logits - mx
            lse = jnp.log(jnp.sum(jnp.exp(shifted), axis=1, keepdims=True))
            out_ref[...] = shifted - lse

    return kernel


def clf_decoder(z, w1, b1, w2, b2, w3, b3,
                compute_dtype=jnp.bfloat16, ts_max=512):
    """z: (S, B, D); weights stored as (D_in, D_out); biases as (1, D_out)."""
    S, B, D = z.shape
    C = w3.shape[1]
    f32 = jnp.float32

    # Lane/sublane-dense padded dims.
    B_pad = _round_up(B, 8)
    D_pad = _round_up(D, 128)
    C_pad = _round_up(C, 128)

    # Sequence tile: largest tile (capped) so the double-buffered bf16 z slab
    # stays far below the v7x-safe scoped-VMEM budget.
    TS = max(1, min(ts_max, S))
    S_pad = _round_up(S, TS)
    grid = (S_pad // TS,)

    zp = jnp.pad(z.astype(compute_dtype),
                 ((0, S_pad - S), (0, B_pad - B), (0, D_pad - D)))
    w1p = jnp.pad(w1.astype(compute_dtype), ((0, D_pad - D), (0, D_pad - D)))
    w2p = jnp.pad(w2.astype(compute_dtype), ((0, D_pad - D), (0, D_pad - D)))
    w3p = jnp.pad(w3.astype(compute_dtype), ((0, D_pad - D), (0, C_pad - C)))
    b1p = jnp.pad(b1.astype(f32), ((0, 0), (0, D_pad - D)))
    b2p = jnp.pad(b2.astype(f32), ((0, 0), (0, D_pad - D)))
    # Padded class columns get a very negative bias so exp() -> 0 and the
    # log_softmax over the padded class axis equals the unpadded result.
    b3p = jnp.pad(b3.astype(f32), ((0, 0), (0, C_pad - C)),
                  constant_values=-1e30)

    kernel = _make_kernel(S, TS, B_pad, D_pad, C_pad)

    itemsize = jnp.dtype(compute_dtype).itemsize
    cost = pl.CostEstimate(
        flops=(2 * S_pad * B_pad * D_pad * D_pad
               + 2 * B_pad * D_pad * D_pad
               + 2 * B_pad * D_pad * C_pad),
        transcendentals=B_pad * C_pad + B_pad,
        bytes_accessed=((zp.size + w1p.size + w2p.size + w3p.size) * itemsize
                        + (b1p.size + b2p.size + b3p.size + B_pad * C_pad) * 4),
    )

    out = pl.pallas_call(
        kernel,
        out_shape=jax.ShapeDtypeStruct((B_pad, C_pad), f32),
        grid_spec=pltpu.PrefetchScalarGridSpec(
            num_scalar_prefetch=0,
            grid=grid,
            in_specs=[
                pl.BlockSpec((TS, B_pad, D_pad), lambda s: (s, 0, 0)),  # z tile
                pl.BlockSpec((D_pad, D_pad), lambda s: (0, 0)),         # w1 (resident)
                pl.BlockSpec((1, D_pad), lambda s: (0, 0)),             # b1
                pl.BlockSpec((D_pad, D_pad), lambda s: (0, 0)),         # w2
                pl.BlockSpec((1, D_pad), lambda s: (0, 0)),             # b2
                pl.BlockSpec((D_pad, C_pad), lambda s: (0, 0)),         # w3
                pl.BlockSpec((1, C_pad), lambda s: (0, 0)),             # b3
            ],
            out_specs=pl.BlockSpec((B_pad, C_pad), lambda s: (0, 0)),
            scratch_shapes=[pltpu.VMEM((B_pad, D_pad), f32)],           # mean acc
        ),
        compiler_params=pltpu.CompilerParams(
            # Single grid axis is the S-reduction -> 'arbitrary'. For large B,
            # add a leading 'parallel' batch axis to occupy both v7x cores.
            dimension_semantics=("arbitrary",),
            vmem_limit_bytes=32 * 1024 * 1024,
        ),
        cost_estimate=cost,
    )(zp, w1p, b1p, w2p, b2p, w3p, b3p)

    return out[:B, :C]


def _ref(z, w1, b1, w2, b2, w3, b3):
    h = jax.nn.relu(jnp.einsum('sbd,de->sbe', z, w1) + b1[None])
    m = jnp.mean(h, axis=0)
    h2 = jax.nn.relu(m @ w2 + b2)
    logits = h2 @ w3 + b3
    return jax.nn.log_softmax(logits, axis=1)


if __name__ == "__main__":
    # Small synthetic shapes consistent with the module's forward:
    # seq S=8, batch B=2, opt_dim D=32, opt_classes C=16.
    S, B, D, C = 8, 2, 32, 16

    key = jax.random.PRNGKey(0)
    ks = jax.random.split(key, 7)

    z = jax.random.normal(ks[0], (S, B, D), dtype=jnp.float32)

    # nn.Linear weights stored transposed as (D_in, D_out); biases (1, D_out).
    w1 = jax.random.normal(ks[1], (D, D), dtype=jnp.float32) * 0.05
    b1 = jax.random.normal(ks[2], (1, D), dtype=jnp.float32) * 0.05
    w2 = jax.random.normal(ks[3], (D, D), dtype=jnp.float32) * 0.05
    b2 = jax.random.normal(ks[4], (1, D), dtype=jnp.float32) * 0.05
    w3 = jax.random.normal(ks[5], (D, C), dtype=jnp.float32) * 0.05
    b3 = jax.random.normal(ks[6], (1, C), dtype=jnp.float32) * 0.05

    out = clf_decoder(z, w1, b1, w2, b2, w3, b3)
    out = jax.block_until_ready(out)

    expected = _ref(z, w1, b1, w2, b2, w3, b3)
    assert out.shape == (B, C), out.shape
    # bf16 MXU operands (accumulation + elementwise math in f32) -> compare
    # against the pure-f32 reference with a correspondingly loose tolerance.
    err = float(jnp.max(jnp.abs(out - expected)))
    assert jnp.allclose(out, expected, atol=2e-2, rtol=2e-2), err

    print("KERNEL_OK")
</pallas_src>

<mosaic_0001>
module attributes {stable_mosaic.version = 11 : i64} {
  func.func @kernel(%arg0: i32, %arg1: memref<8x8x128xbf16, #tpu.memory_space<vmem>>, %arg2: memref<128x128xbf16, #tpu.memory_space<vmem>>, %arg3: memref<1x128xf32, #tpu.memory_space<vmem>>, %arg4: memref<128x128xbf16, #tpu.memory_space<vmem>>, %arg5: memref<1x128xf32, #tpu.memory_space<vmem>>, %arg6: memref<128x128xbf16, #tpu.memory_space<vmem>>, %arg7: memref<1x128xf32, #tpu.memory_space<vmem>>, %arg8: memref<8x128xf32, #tpu.memory_space<vmem>>, %arg9: memref<8x128xf32, #tpu.memory_space<vmem>>) attributes {dimension_semantics = [#tpu.dimension_semantics<arbitrary>], iteration_bounds = array<i64: 1>, scalar_prefetch = 0 : i64, scratch_operands = 1 : i64, tpu.core_type = #tpu.core_type<tc>, window_params = [{transform_indices = @transform_0, window_bounds = array<i64: 8, 8, 128>}, {pipeline_mode = #tpu.pipeline_mode<synchronous>, transform_indices = @transform_1, window_bounds = array<i64: 128, 128>}, {pipeline_mode = #tpu.pipeline_mode<synchronous>, transform_indices = @transform_2, window_bounds = array<i64: 1, 128>}, {pipeline_mode = #tpu.pipeline_mode<synchronous>, transform_indices = @transform_3, window_bounds = array<i64: 128, 128>}, {pipeline_mode = #tpu.pipeline_mode<synchronous>, transform_indices = @transform_4, window_bounds = array<i64: 1, 128>}, {pipeline_mode = #tpu.pipeline_mode<synchronous>, transform_indices = @transform_5, window_bounds = array<i64: 128, 128>}, {pipeline_mode = #tpu.pipeline_mode<synchronous>, transform_indices = @transform_6, window_bounds = array<i64: 1, 128>}, {pipeline_mode = #tpu.pipeline_mode<synchronous>, transform_indices = @transform_7, window_bounds = array<i64: 8, 128>}]} {
    %c0_i32 = arith.constant 0 : i32
    %0 = arith.cmpi eq, %arg0, %c0_i32 : i32
    %1 = arith.extui %0 : i1 to i32
    %c0_i32_0 = arith.constant 0 : i32
    %2 = arith.cmpi ne, %1, %c0_i32_0 : i32
    scf.if %2 {
      %cst_15 = arith.constant 0.000000e+00 : f32
      %20 = vector.broadcast %cst_15 : f32 to vector<8x128xf32>
      %c0_16 = arith.constant 0 : index
      %c0_17 = arith.constant 0 : index
      %21 = vector.load %arg9[%c0_16, %c0_17] : memref<8x128xf32, #tpu.memory_space<vmem>>, vector<8x128xf32>
      tpu.vector_store %arg9[%c0_16, %c0_17], %20 {strides = array<i32>} : memref<8x128xf32, #tpu.memory_space<vmem>>, vector<8x128xf32>,
    } else {
    }
    %c0 = arith.constant 0 : index
    %c0_1 = arith.constant 0 : index
    %c0_2 = arith.constant 0 : index
    %3 = vector.load %arg1[%c0, %c0_1, %c0_2] : memref<8x8x128xbf16, #tpu.memory_space<vmem>>, vector<8x8x128xbf16>
    %4 = vector.shape_cast %3 : vector<8x8x128xbf16> to vector<64x128xbf16>
    %c0_3 = arith.constant 0 : index
    %c0_4 = arith.constant 0 : index
    %5 = vector.load %arg2[%c0_3, %c0_4] : memref<128x128xbf16, #tpu.memory_space<vmem>>, vector<128x128xbf16>
    %cst = arith.constant dense<0.000000e+00> : vector<64x128xf32>
    %6 = tpu.matmul %4, %5, %cst {dimension_numbers = #tpu.dot_dimension_numbers<[1], [0], [0], [1], [0, 0, 1, 1], [], []>} : vector<64x128xbf16>, vector<128x128xbf16>, vector<64x128xf32> -> vector<64x128xf32>
    %c0_5 = arith.constant 0 : index
    %c0_6 = arith.constant 0 : index
    %7 = vector.load %arg3[%c0_5, %c0_6] : memref<1x128xf32, #tpu.memory_space<vmem>>, vector<1x128xf32>
    %8 = vector.broadcast %7 : vector<1x128xf32> to vector<64x128xf32>
    %9 = arith.addf %6, %8 : vector<64x128xf32>
    %cst_7 = arith.constant 0.000000e+00 : f32
    %10 = vector.broadcast %cst_7 : f32 to vector<64x128xf32>
    %11 = arith.maximumf %9, %10 : vector<64x128xf32>
    %12 = vector.shape_cast %11 : vector<64x128xf32> to vector<8x8x128xf32>
    %c0_8 = arith.constant 0 : index
    %c0_9 = arith.constant 0 : index
    %13 = vector.load %arg9[%c0_8, %c0_9] : memref<8x128xf32, #tpu.memory_space<vmem>>, vector<8x128xf32>
    %cst_10 = arith.constant dense<0.000000e+00> : vector<8x128xf32>
    %14 = vector.multi_reduction <add>, %12, %cst_10 [0] : vector<8x8x128xf32> to vector<8x128xf32>
    %15 = arith.addf %13, %14 : vector<8x128xf32>
    %c0_11 = arith.constant 0 : index
    %c0_12 = arith.constant 0 : index
    %16 = vector.load %arg9[%c0_11, %c0_12] : memref<8x128xf32, #tpu.memory_space<vmem>>, vector<8x128xf32>
    tpu.vector_store %arg9[%c0_11, %c0_12], %15 {strides = array<i32>} : memref<8x128xf32, #tpu.memory_space<vmem>>, vector<8x128xf32>,
    %c0_i32_13 = arith.constant 0 : i32
    %17 = arith.cmpi eq, %arg0, %c0_i32_13 : i32
    %18 = arith.extui %17 : i1 to i32
    %c0_i32_14 = arith.constant 0 : i32
    %19 = arith.cmpi ne, %18, %c0_i32_14 : i32
    scf.if %19 {
      %c0_15 = arith.constant 0 : index
      %c0_16 = arith.constant 0 : index
      %20 = vector.load %arg9[%c0_15, %c0_16] : memref<8x128xf32, #tpu.memory_space<vmem>>, vector<8x128xf32>
      %cst_17 = arith.constant 1.250000e-01 : f32
      %21 = vector.broadcast %cst_17 : f32 to vector<8x128xf32>
      %22 = arith.mulf %20, %21 : vector<8x128xf32>
      %23 = arith.truncf %22 : vector<8x128xf32> to vector<8x128xbf16>
      %c0_18 = arith.constant 0 : index
      %c0_19 = arith.constant 0 : index
      %24 = vector.load %arg4[%c0_18, %c0_19] : memref<128x128xbf16, #tpu.memory_space<vmem>>, vector<128x128xbf16>
      %cst_20 = arith.constant dense<0.000000e+00> : vector<8x128xf32>
      %25 = tpu.matmul %23, %24, %cst_20 {dimension_numbers = #tpu.dot_dimension_numbers<[1], [0], [0], [1], [0, 0, 1, 1], [], []>} : vector<8x128xbf16>, vector<128x128xbf16>, vector<8x128xf32> -> vector<8x128xf32>
      %c0_21 = arith.constant 0 : index
      %c0_22 = arith.constant 0 : index
      %26 = vector.load %arg5[%c0_21, %c0_22] : memref<1x128xf32, #tpu.memory_space<vmem>>, vector<1x128xf32>
      %27 = vector.broadcast %26 : vector<1x128xf32> to vector<8x128xf32>
      %28 = arith.addf %25, %27 : vector<8x128xf32>
      %cst_23 = arith.constant 0.000000e+00 : f32
      %29 = vector.broadcast %cst_23 : f32 to vector<8x128xf32>
      %30 = arith.maximumf %28, %29 : vector<8x128xf32>
      %31 = arith.truncf %30 : vector<8x128xf32> to vector<8x128xbf16>
      %c0_24 = arith.constant 0 : index
      %c0_25 = arith.constant 0 : index
      %32 = vector.load %arg6[%c0_24, %c0_25] : memref<128x128xbf16, #tpu.memory_space<vmem>>, vector<128x128xbf16>
      %cst_26 = arith.constant dense<0.000000e+00> : vector<8x128xf32>
      %33 = tpu.matmul %31, %32, %cst_26 {dimension_numbers = #tpu.dot_dimension_numbers<[1], [0], [0], [1], [0, 0, 1, 1], [], []>} : vector<8x128xbf16>, vector<128x128xbf16>, vector<8x128xf32> -> vector<8x128xf32>
      %c0_27 = arith.constant 0 : index
      %c0_28 = arith.constant 0 : index
      %34 = vector.load %arg7[%c0_27, %c0_28] : memref<1x128xf32, #tpu.memory_space<vmem>>, vector<1x128xf32>
      %35 = vector.broadcast %34 : vector<1x128xf32> to vector<8x128xf32>
      %36 = arith.addf %33, %35 : vector<8x128xf32>
      %cst_29 = arith.constant dense<0xFF800000> : vector<8xf32>
      %37 = vector.multi_reduction <maximumf>, %36, %cst_29 [1] : vector<8x128xf32> to vector<8xf32>
      %38 = vector.shape_cast %37 : vector<8xf32> to vector<8x1xf32>
      %39 = vector.broadcast %38 : vector<8x1xf32> to vector<8x128xf32>
      %40 = arith.subf %36, %39 : vector<8x128xf32>
      %41 = math.exp %40 : vector<8x128xf32>
      %cst_30 = arith.constant dense<0.000000e+00> : vector<8xf32>
      %42 = vector.multi_reduction <add>, %41, %cst_30 [1] : vector<8x128xf32> to vector<8xf32>
      %43 = vector.shape_cast %42 : vector<8xf32> to vector<8x1xf32>
      %44 = math.log %43 : vector<8x1xf32>
      %45 = vector.broadcast %44 : vector<8x1xf32> to vector<8x128xf32>
      %46 = arith.subf %40, %45 : vector<8x128xf32>
      %c0_31 = arith.constant 0 : index
      %c0_32 = arith.constant 0 : index
      %47 = vector.load %arg8[%c0_31, %c0_32] : memref<8x128xf32, #tpu.memory_space<vmem>>, vector<8x128xf32>
      tpu.vector_store %arg8[%c0_31, %c0_32], %46 {strides = array<i32>} : memref<8x128xf32, #tpu.memory_space<vmem>>, vector<8x128xf32>,
    } else {
    }
    return
  }
  func.func @transform_0(%arg0: i32) -> (i32, i32, i32) {
    %c0_i32 = arith.constant 0 : i32
    %c0_i32_0 = arith.constant 0 : i32
    %c0_i32_1 = arith.constant 0 : i32
    return %arg0, %c0_i32, %c0_i32_0 : i32, i32, i32
  }
  func.func @transform_1(%arg0: i32) -> (i32, i32) {
    %c0_i32 = arith.constant 0 : i32
    %c0_i32_0 = arith.constant 0 : i32
    %c0_i32_1 = arith.constant 0 : i32
    return %c0_i32, %c0_i32_0 : i32, i32
  }
  func.func @transform_2(%arg0: i32) -> (i32, i32) {
    %c0_i32 = arith.constant 0 : i32
    %c0_i32_0 = arith.constant 0 : i32
    %c0_i32_1 = arith.constant 0 : i32
    return %c0_i32, %c0_i32_0 : i32, i32
  }
  func.func @transform_3(%arg0: i32) -> (i32, i32) {
    %c0_i32 = arith.constant 0 : i32
    %c0_i32_0 = arith.constant 0 : i32
    %c0_i32_1 = arith.constant 0 : i32
    return %c0_i32, %c0_i32_0 : i32, i32
  }
  func.func @transform_4(%arg0: i32) -> (i32, i32) {
    %c0_i32 = arith.constant 0 : i32
    %c0_i32_0 = arith.constant 0 : i32
    %c0_i32_1 = arith.constant 0 : i32
    return %c0_i32, %c0_i32_0 : i32, i32
  }
  func.func @transform_5(%arg0: i32) -> (i32, i32) {
    %c0_i32 = arith.constant 0 : i32
    %c0_i32_0 = arith.constant 0 : i32
    %c0_i32_1 = arith.constant 0 : i32
    return %c0_i32, %c0_i32_0 : i32, i32
  }
  func.func @transform_6(%arg0: i32) -> (i32, i32) {
    %c0_i32 = arith.constant 0 : i32
    %c0_i32_0 = arith.constant 0 : i32
    %c0_i32_1 = arith.constant 0 : i32
    return %c0_i32, %c0_i32_0 : i32, i32
  }
  func.func @transform_7(%arg0: i32) -> (i32, i32) {
    %c0_i32 = arith.constant 0 : i32
    %c0_i32_0 = arith.constant 0 : i32
    %c0_i32_1 = arith.constant 0 : i32
    return %c0_i32, %c0_i32_0 : i32, i32
  }
}

</mosaic_0001>

<llo_original>
// kernel: tpu_custom_call.1
$region0: #{tpu_custom_call.1}
  #allocation0 [shape = 'u32[]', space=smem, size = 0x4, offset = 0x4, fixed_abs, tag = 'smem constant byte address 0x4 - core index']
  #allocation1 [shape = 'u32[144,128]{1,0:T(1,128)}', space=vmem, size = 0x12000, scoped, tag = 'internal scratch']
  #allocation2 [shape = 'f32[8,128]{1,0:T(8,128)}', space=vmem, size = 0x1000, scoped, tag = 'scratch operand']
  %s0 = inlined_call_operand.hbm [shape: bf16[8,8,128], index: 0, kind: input, shape index: {}]
  %s1 = inlined_call_operand.hbm [shape: bf16[128,128], index: 1, kind: input, shape index: {}]
  %s2 = inlined_call_operand.vmem [shape: f32[1,128], index: 2, kind: input, shape index: {}]
  %s3 = inlined_call_operand.hbm [shape: bf16[128,128], index: 3, kind: input, shape index: {}]
  %s4 = inlined_call_operand.vmem [shape: f32[1,128], index: 4, kind: input, shape index: {}]
  %s5 = inlined_call_operand.hbm [shape: bf16[128,128], index: 5, kind: input, shape index: {}]
  %s6 = inlined_call_operand.vmem [shape: f32[1,128], index: 6, kind: input, shape index: {}]
  %s7 = inlined_call_operand.hbm [shape: f32[8,128], index: 7, kind: output, shape index: {}]
  %s8 = sld [smem:[#allocation0]]
  $region62: #{tpu_custom_call.1} parent=0
    _
  %s10 = ssub.s32 1, %s8
  %s11 = scalar_select 0, %s10, %s8
  $region1: #{tpu_custom_call.1} parent=0
    #allocation3 [shape = 'u8[16384]{0}', space=vmem, size = 0x4000, scoped, tag = 'input window, operand 0, single buffered']
    #allocation4 [shape = 's32[1]{0}', space=sflag, size = 0x4, scoped, tag = 'scoped memory for tpu_custom_call.1']
    #allocation5 [shape = 's32[1]{0}', space=sflag, size = 0x4, scoped, tag = 'scoped memory for tpu_custom_call.1']
    #allocation6 [shape = 'u8[32768]{0}', space=vmem, size = 0x8000, scoped, tag = 'input window, operand 1, single buffered']
    #allocation7 [shape = 's32[1]{0}', space=sflag, size = 0x4, scoped, tag = 'scoped memory for tpu_custom_call.1']
    #allocation8 [shape = 'u8[32768]{0}', space=vmem, size = 0x8000, scoped, tag = 'input window, operand 3, single buffered']
    #allocation9 [shape = 'u8[32768]{0}', space=vmem, size = 0x8000, scoped, tag = 'input window, operand 5, single buffered']
    #allocation10 [shape = 's32[1]{0}', space=sflag, size = 0x4, scoped, tag = 'scoped memory for tpu_custom_call.1']
    #allocation11 [shape = 'u8[4096]{0}', space=vmem, size = 0x1000, scoped, tag = 'output window, operand 0, single buffered']
    %12 = vsyncpa [#allocation4], 0
    %13 = vsyncpa [#allocation7], 0
    %14 = vsyncpa [#allocation10], 0
    %15 = vsyncpa [#allocation5], 0
    // Predicated region
    $region2: #{tpu_custom_call.1} parent=1 // pred_check
      _
    $region3: #{tpu_custom_call.1} parent=1 // pred_check_branch
      %17 = sbr.rel (0) target = $region5
    $region4: #{tpu_custom_call.1} parent=1 // pred_region
      %s19 = ssub.s32 512, 512
      %20 = vsyncadd [#allocation4], %s19
      %s21 = sshll.u32 [#allocation3], 4
      %s22 = int_to_ptr.vmem [resolvable:$true] %s21
      %27 = dma.hbm_to_vmem [thread:$0]  %s0, 512, %s22, [#allocation4], 64, 64, 4
    $region5: #{tpu_custom_call.1} parent=1 // pred_fallthru
      _
    // Predicated region
    $region6: #{tpu_custom_call.1} parent=1 // pred_check
      _
    $region7: #{tpu_custom_call.1} parent=1 // pred_check_branch
      %29 = sbr.rel (0) target = $region9
    $region8: #{tpu_custom_call.1} parent=1 // pred_region
      %s31 = ssub.s32 1024, 1024
      %32 = vsyncadd [#allocation7], %s31
      %s33 = sshll.u32 [#allocation6], 4
      %s34 = int_to_ptr.vmem [resolvable:$true] %s33
      %39 = dma.hbm_to_vmem [thread:$0]  %s1, 1024, %s34, [#allocation7], 64, 64, 4
    $region9: #{tpu_custom_call.1} parent=1 // pred_fallthru
      _
    // Predicated region
    $region10: #{tpu_custom_call.1} parent=1 // pred_check
      _
    $region11: #{tpu_custom_call.1} parent=1 // pred_check_branch
      %41 = sbr.rel (0) target = $region13
    $region12: #{tpu_custom_call.1} parent=1 // pred_region
      _
    $region13: #{tpu_custom_call.1} parent=1 // pred_fallthru
      _
    // Predicated region
    $region14: #{tpu_custom_call.1} parent=1 // pred_check
      _
    $region15: #{tpu_custom_call.1} parent=1 // pred_check_branch
      %43 = sbr.rel (0) target = $region17
    $region16: #{tpu_custom_call.1} parent=1 // pred_region
      %s45 = ssub.s32 1024, 1024
      %46 = vsyncadd [#allocation7], %s45
      %s47 = sshll.u32 [#allocation8], 4
      %s48 = int_to_ptr.vmem [resolvable:$true] %s47
      %53 = dma.hbm_to_vmem [thread:$0]  %s3, 1024, %s48, [#allocation7], 64, 64, 4
    $region17: #{tpu_custom_call.1} parent=1 // pred_fallthru
      _
    // Predicated region
    $region18: #{tpu_custom_call.1} parent=1 // pred_check
      _
    $region19: #{tpu_custom_call.1} parent=1 // pred_check_branch
      %55 = sbr.rel (0) target = $region21
    $region20: #{tpu_custom_call.1} parent=1 // pred_region
      _
    $region21: #{tpu_custom_call.1} parent=1 // pred_fallthru
      _
    // Predicated region
    $region22: #{tpu_custom_call.1} parent=1 // pred_check
      _
    $region23: #{tpu_custom_call.1} parent=1 // pred_check_branch
      %57 = sbr.rel (0) target = $region25
    $region24: #{tpu_custom_call.1} parent=1 // pred_region
      %s59 = ssub.s32 1024, 1024
      %60 = vsyncadd [#allocation10], %s59
      %s61 = sshll.u32 [#allocation9], 4
      %s62 = int_to_ptr.vmem [resolvable:$true] %s61
      %67 = dma.hbm_to_vmem [thread:$0]  %s5, 1024, %s62, [#allocation10], 64, 64, 4
    $region25: #{tpu_custom_call.1} parent=1 // pred_fallthru
      _
    // Predicated region
    $region26: #{tpu_custom_call.1} parent=1 // pred_check
      _
    $region27: #{tpu_custom_call.1} parent=1 // pred_check_branch
      %69 = sbr.rel (0) target = $region29
    $region28: #{tpu_custom_call.1} parent=1 // pred_region
      _
    $region29: #{tpu_custom_call.1} parent=1 // pred_fallthru
      _
    // Predicated region
    $region30: #{tpu_custom_call.1} parent=1 // pred_check
      _
    $region31: #{tpu_custom_call.1} parent=1 // pred_check_branch
      %71 = sbr.rel (0) target = $region33
    $region32: #{tpu_custom_call.1} parent=1 // pred_region
      %72 = dma.done [#allocation4], 512
    $region33: #{tpu_custom_call.1} parent=1 // pred_fallthru
      _
    // Predicated region
    $region34: #{tpu_custom_call.1} parent=1 // pred_check
      _
    $region35: #{tpu_custom_call.1} parent=1 // pred_check_branch
      %74 = sbr.rel (0) target = $region37
    $region36: #{tpu_custom_call.1} parent=1 // pred_region
      %75 = dma.done [#allocation7], 1024
    $region37: #{tpu_custom_call.1} parent=1 // pred_fallthru
      _
    // Predicated region
    $region38: #{tpu_custom_call.1} parent=1 // pred_check
      _
    $region39: #{tpu_custom_call.1} parent=1 // pred_check_branch
      %77 = sbr.rel (0) target = $region41
    $region40: #{tpu_custom_call.1} parent=1 // pred_region
      %78 = dma.done [#allocation7], 1024
    $region41: #{tpu_custom_call.1} parent=1 // pred_fallthru
      _
    // Predicated region
    $region42: #{tpu_custom_call.1} parent=1 // pred_check
      _
    $region43: #{tpu_custom_call.1} parent=1 // pred_check_branch
      %80 = sbr.rel (0) target = $region45
    $region44: #{tpu_custom_call.1} parent=1 // pred_region
      %81 = dma.done [#allocation10], 1024
    $region45: #{tpu_custom_call.1} parent=1 // pred_fallthru
      _
    %p83 = scmp.eq.s32.totalorder 0, 0
    // Predicated region
    $region46: #{tpu_custom_call.1} parent=1 // pred_check
      %p84 = pneg %p83
    $region47: #{tpu_custom_call.1} parent=1 // pred_check_branch
      %86 = sbr.rel (%p84) target = $region49
    $region48: #{tpu_custom_call.1} parent=1 // pred_region
      %87 = vst [vmem:[#allocation2] sm:$0xff] 0.0
    $region49: #{tpu_custom_call.1} parent=1 // pred_fallthru
      _
    %v88 = vld [vmem:[#allocation3] sm:$0xf]
    %v89 = vld [vmem:[#allocation3 + $0x4] sm:$0xf]
    %v90 = vld [vmem:[#allocation3 + $0x8] sm:$0xf]
    %v91 = vld [vmem:[#allocation3 + $0xc] sm:$0xf]
    %v92 = vld [vmem:[#allocation3 + $0x10] sm:$0xf]
    %v93 = vld [vmem:[#allocation3 + $0x14] sm:$0xf]
    %v94 = vld [vmem:[#allocation3 + $0x18] sm:$0xf]
    %v95 = vld [vmem:[#allocation3 + $0x1c] sm:$0xf]
    %v96 = vld [vmem:[#allocation6] sm:$0xf]
    %v97 = vld [vmem:[#allocation6 + $0x4] sm:$0xf]
    %v98 = vld [vmem:[#allocation6 + $0x8] sm:$0xf]
    %v99 = vld [vmem:[#allocation6 + $0xc] sm:$0xf]
    %v100 = vld [vmem:[#allocation6 + $0x10] sm:$0xf]
    %v101 = vld [vmem:[#allocation6 + $0x14] sm:$0xf]
    %v102 = vld [vmem:[#allocation6 + $0x18] sm:$0xf]
    %v103 = vld [vmem:[#allocation6 + $0x1c] sm:$0xf]
    %v104 = vld [vmem:[#allocation6 + $0x20] sm:$0xf]
    %v105 = vld [vmem:[#allocation6 + $0x24] sm:$0xf]
    %v106 = vld [vmem:[#allocation6 + $0x28] sm:$0xf]
    %v107 = vld [vmem:[#allocation6 + $0x2c] sm:$0xf]
    %v108 = vld [vmem:[#allocation6 + $0x30] sm:$0xf]
    %v109 = vld [vmem:[#allocation6 + $0x34] sm:$0xf]
    %v110 = vld [vmem:[#allocation6 + $0x38] sm:$0xf]
    %v111 = vld [vmem:[#allocation6 + $0x3c] sm:$0xf]
    %v112 = vld [vmem:[%s2] sm:$0x1]
    %v114 = vlaneseq
    %v115 = vshrl.u32 %v114, 7
    %v116 = vsub.s32 0, %v115
    %v117 = vrot.slane %v112, %v116
    %v127 = vunpack.c.l.b16 %v88
    %v128 = vunpack.c.l.b16 %v89
    %v129 = vunpack.c.l.b16 %v90
    %v130 = vunpack.c.l.b16 %v91
    %v131 = vunpack.c.l.b16 %v92
    %v132 = vunpack.c.l.b16 %v93
    %v133 = vunpack.c.l.b16 %v94
    %v134 = vunpack.c.l.b16 %v95
    %v135 = vpack.c.b16 %v128, %v127
    %v136 = vpack.c.b16 %v130, %v129
    %v137 = vpack.c.b16 %v132, %v131
    %v138 = vpack.c.b16 %v134, %v133
    %v159 = vunpack.c.l.b16 %v96
    %v160 = vunpack.c.l.b16 %v97
    %v161 = vunpack.c.l.b16 %v98
    %v162 = vunpack.c.l.b16 %v99
    %v163 = vunpack.c.l.b16 %v100
    %v164 = vunpack.c.l.b16 %v101
    %v165 = vunpack.c.l.b16 %v102
    %v166 = vunpack.c.l.b16 %v103
    %v167 = vunpack.c.l.b16 %v104
    %v168 = vunpack.c.l.b16 %v105
    %v169 = vunpack.c.l.b16 %v106
    %v170 = vunpack.c.l.b16 %v107
    %v171 = vunpack.c.l.b16 %v108
    %v172 = vunpack.c.l.b16 %v109
    %v173 = vunpack.c.l.b16 %v110
    %v174 = vunpack.c.l.b16 %v111
    %v175 = vpack.c.b16 %v160, %v159
    %v176 = vpack.c.b16 %v162, %v161
    %v177 = vpack.c.b16 %v164, %v163
    %v178 = vpack.c.b16 %v166, %v165
    %v179 = vpack.c.b16 %v168, %v167
    %v180 = vpack.c.b16 %v170, %v169
    %v181 = vpack.c.b16 %v172, %v171
    %v182 = vpack.c.b16 %v174, %v173
    %191 = vmatprep.subr.bf16.mxu0 0
    %192 = vmatpush1.bf16.msra.mxu0 %v175
    %193 = vmatprep.subr.bf16.mxu0 0
    %194 = vmatpush1.bf16.msra.mxu0 %v176
    %195 = vmatprep.subr.bf16.mxu0 0
    %196 = vmatpush1.bf16.msra.mxu0 %v177
    %197 = vmatprep.subr.bf16.mxu0 0
    %198 = vmatpush1.bf16.msra.mxu0 %v178
    %199 = vmatprep.subr.bf16.mxu0 0
    %200 = vmatpush1.bf16.msra.mxu0 %v179
    %201 = vmatprep.subr.bf16.mxu0 0
    %202 = vmatpush1.bf16.msra.mxu0 %v180
    %203 = vmatprep.subr.bf16.mxu0 0
    %204 = vmatpush1.bf16.msra.mxu0 %v181
    %205 = vmatprep.subr.bf16.mxu0 0
    %206 = vmatpush1.bf16.msra.mxu0 %v182
    %207 = vmatprep.subr.bf16.mxu0 0
    %208 = vmatpush1.bf16.msra.mxu0 0
    %209 = vmatprep.subr.bf16.mxu0 0
    %210 = vmatpush1.bf16.msra.mxu0 0
    %211 = vmatprep.subr.bf16.mxu0 0
    %212 = vmatpush1.bf16.msra.mxu0 0
    %213 = vmatprep.subr.bf16.mxu0 0
    %214 = vmatpush1.bf16.msra.mxu0 0
    %215 = vmatprep.subr.bf16.mxu0 0
    %216 = vmatpush1.bf16.msra.mxu0 0
    %217 = vmatprep.subr.bf16.mxu0 0
    %218 = vmatpush1.bf16.msra.mxu0 0
    %219 = vmatprep.subr.bf16.mxu0 0
    %220 = vmatpush1.bf16.msra.mxu0 0
    %221 = vmatprep.subr.bf16.mxu0 0
    %222 = vmatpush1.bf16.msra.mxu0 0
    %223 = vmatprep.mubr.bf16.mxu0 0
    %224 = vmatmul.mubr.bf16.gmra.mrb[0].mxu0 %v135
    %v225 = vpop.f32.mrb[0].mxu0
    %v226 = vadd.f32 %v117, %v225
    %v227 = vpop.f32.mrb[0].mxu0
    %v228 = vpop.f32.mrb[0].mxu0
    %v229 = vadd.f32 %v117, %v228
    %v230 = vpop.f32.mrb[0].mxu0
    %231 = vmatprep.mubr.bf16.mxu0 0
    %232 = vmatmul.mubr.bf16.gmra.mrb[0].mxu0 %v136
    %v233 = vpop.f32.mrb[0].mxu0
    %v234 = vadd.f32 %v117, %v233
    %v235 = vpop.f32.mrb[0].mxu0
    %v236 = vpop.f32.mrb[0].mxu0
    %v237 = vadd.f32 %v117, %v236
    %v238 = vpop.f32.mrb[0].mxu0
    %239 = vmatprep.mubr.bf16.mxu0 0
    %240 = vmatmul.mubr.bf16.gmra.mrb[0].mxu0 %v137
    %v241 = vpop.f32.mrb[0].mxu0
    %v242 = vadd.f32 %v117, %v241
    %v243 = vpop.f32.mrb[0].mxu0
    %v244 = vpop.f32.mrb[0].mxu0
    %v245 = vadd.f32 %v117, %v244
    %v246 = vpop.f32.mrb[0].mxu0
    %247 = vmatprep.mubr.bf16.mxu0 0
    %248 = vmatmul.mubr.bf16.gmra.mrb[0].mxu0 %v138
    %v249 = vpop.f32.mrb[0].mxu0
    %v250 = vadd.f32 %v117, %v249
    %v251 = vpop.f32.mrb[0].mxu0
    %v252 = vpop.f32.mrb[0].mxu0
    %v253 = vadd.f32 %v117, %v252
    %v254 = vpop.f32.mrb[0].mxu0
    %255 = vdwg.mxu0
    %v256 = vmax.f32 %v226, 0.0
    %v257 = vmax.f32 %v229, 0.0
    %v258 = vmax.f32 %v234, 0.0
    %v259 = vmax.f32 %v237, 0.0
    %v260 = vmax.f32 %v242, 0.0
    %v261 = vmax.f32 %v245, 0.0
    %v262 = vmax.f32 %v250, 0.0
    %v263 = vmax.f32 %v253, 0.0
    %v264 = vld [vmem:[#allocation2] sm:$0xff]
    %v265 = vadd.f32 %v256, %v257
    %v266 = vadd.f32 %v265, %v258
    %v267 = vadd.f32 %v266, %v259
    %v268 = vadd.f32 %v267, %v260
    %v269 = vadd.f32 %v268, %v261
    %v270 = vadd.f32 %v269, %v262
    %v271 = vadd.f32 %v270, %v263
    %v272 = vadd.f32 %v264, %v271
    %273 = vst [vmem:[#allocation2] sm:$0xff] %v272
    // Predicated region
    $region50: #{tpu_custom_call.1} parent=1 // pred_check
      %p274 = pneg %p83
    $region51: #{tpu_custom_call.1} parent=1 // pred_check_branch
      %276 = sbr.rel (%p274) target = $region53
    $region52: #{tpu_custom_call.1} parent=1 // pred_region
      %v277 = vld [vmem:[#allocation2] sm:$0xff]
      %v278 = vmul.f32 %v277, 0.125
      %v279 = vpack.c.bf16 %v278, %v278
      %v280 = vld [vmem:[#allocation8] sm:$0xf]
      %v281 = vld [vmem:[#allocation8 + $0x4] sm:$0xf]
      %v282 = vld [vmem:[#allocation8 + $0x8] sm:$0xf]
      %v283 = vld [vmem:[#allocation8 + $0xc] sm:$0xf]
      %v284 = vld [vmem:[#allocation8 + $0x10] sm:$0xf]
      %v285 = vld [vmem:[#allocation8 + $0x14] sm:$0xf]
      %v286 = vld [vmem:[#allocation8 + $0x18] sm:$0xf]
      %v287 = vld [vmem:[#allocation8 + $0x1c] sm:$0xf]
      %v288 = vld [vmem:[#allocation8 + $0x20] sm:$0xf]
      %v289 = vld [vmem:[#allocation8 + $0x24] sm:$0xf]
      %v290 = vld [vmem:[#allocation8 + $0x28] sm:$0xf]
      %v291 = vld [vmem:[#allocation8 + $0x2c] sm:$0xf]
      %v292 = vld [vmem:[#allocation8 + $0x30] sm:$0xf]
      %v293 = vld [vmem:[#allocation8 + $0x34] sm:$0xf]
      %v294 = vld [vmem:[#allocation8 + $0x38] sm:$0xf]
      %v295 = vld [vmem:[#allocation8 + $0x3c] sm:$0xf]
      %v296 = vld [vmem:[%s4] sm:$0x1]
      %v298 = vlaneseq
      %v299 = vshrl.u32 %v298, 7
      %v300 = vsub.s32 0, %v299
      %v301 = vrot.slane %v296, %v300
      %v319 = vunpack.c.l.b16 %v280
      %v320 = vunpack.c.l.b16 %v281
      %v321 = vunpack.c.l.b16 %v282
      %v322 = vunpack.c.l.b16 %v283
      %v323 = vunpack.c.l.b16 %v284
      %v324 = vunpack.c.l.b16 %v285
      %v325 = vunpack.c.l.b16 %v286
      %v326 = vunpack.c.l.b16 %v287
      %v327 = vunpack.c.l.b16 %v288
      %v328 = vunpack.c.l.b16 %v289
      %v329 = vunpack.c.l.b16 %v290
      %v330 = vunpack.c.l.b16 %v291
      %v331 = vunpack.c.l.b16 %v292
      %v332 = vunpack.c.l.b16 %v293
      %v333 = vunpack.c.l.b16 %v294
      %v334 = vunpack.c.l.b16 %v295
      %v335 = vpack.c.b16 %v320, %v319
      %v336 = vpack.c.b16 %v322, %v321
      %v337 = vpack.c.b16 %v324, %v323
      %v338 = vpack.c.b16 %v326, %v325
      %v339 = vpack.c.b16 %v328, %v327
      %v340 = vpack.c.b16 %v330, %v329
      %v341 = vpack.c.b16 %v332, %v331
      %v342 = vpack.c.b16 %v334, %v333
      %351 = vmatprep.subr.bf16.mxu0 0
      %352 = vmatpush1.bf16.msra.mxu0 %v335
      %353 = vmatprep.subr.bf16.mxu0 0
      %354 = vmatpush1.bf16.msra.mxu0 %v336
      %355 = vmatprep.subr.bf16.mxu0 0
      %356 = vmatpush1.bf16.msra.mxu0 %v337
      %357 = vmatprep.subr.bf16.mxu0 0
      %358 = vmatpush1.bf16.msra.mxu0 %v338
      %359 = vmatprep.subr.bf16.mxu0 0
      %360 = vmatpush1.bf16.msra.mxu0 %v339
      %361 = vmatprep.subr.bf16.mxu0 0
      %362 = vmatpush1.bf16.msra.mxu0 %v340
      %363 = vmatprep.subr.bf16.mxu0 0
      %364 = vmatpush1.bf16.msra.mxu0 %v341
      %365 = vmatprep.subr.bf16.mxu0 0
      %366 = vmatpush1.bf16.msra.mxu0 %v342
      %367 = vmatprep.subr.bf16.mxu0 0
      %368 = vmatpush1.bf16.msra.mxu0 0
      %369 = vmatprep.subr.bf16.mxu0 0
      %370 = vmatpush1.bf16.msra.mxu0 0
      %371 = vmatprep.subr.bf16.mxu0 0
      %372 = vmatpush1.bf16.msra.mxu0 0
      %373 = vmatprep.subr.bf16.mxu0 0
      %374 = vmatpush1.bf16.msra.mxu0 0
      %375 = vmatprep.subr.bf16.mxu0 0
      %376 = vmatpush1.bf16.msra.mxu0 0
      %377 = vmatprep.subr.bf16.mxu0 0
      %378 = vmatpush1.bf16.msra.mxu0 0
      %379 = vmatprep.subr.bf16.mxu0 0
      %380 = vmatpush1.bf16.msra.mxu0 0
      %381 = vmatprep.subr.bf16.mxu0 0
      %382 = vmatpush1.bf16.msra.mxu0 0
      %383 = vmatprep.mubr.bf16.mxu0 0
      %384 = vmatmul.mubr.bf16.gmra.mrb[0].mxu0 %v279
      %v385 = vpop.f32.mrb[0].mxu0
      %v386 = vadd.f32 %v301, %v385
      %v387 = vpop.f32.mrb[0].mxu0
      %v388 = vpop.f32.mrb[0].mxu0
      %v389 = vpop.f32.mrb[0].mxu0
      %390 = vdwg.mxu0
      %v391 = vmax.f32 %v386, 0.0
      %v392 = vpack.c.bf16 %v391, %v391
      %v393 = vld [vmem:[#allocation9] sm:$0xf]
      %v394 = vld [vmem:[#allocation9 + $0x4] sm:$0xf]
      %v395 = vld [vmem:[#allocation9 + $0x8] sm:$0xf]
      %v396 = vld [vmem:[#allocation9 + $0xc] sm:$0xf]
      %v397 = vld [vmem:[#allocation9 + $0x10] sm:$0xf]
      %v398 = vld [vmem:[#allocation9 + $0x14] sm:$0xf]
      %v399 = vld [vmem:[#allocation9 + $0x18] sm:$0xf]
      %v400 = vld [vmem:[#allocation9 + $0x1c] sm:$0xf]
      %v401 = vld [vmem:[#allocation9 + $0x20] sm:$0xf]
      %v402 = vld [vmem:[#allocation9 + $0x24] sm:$0xf]
      %v403 = vld [vmem:[#allocation9 + $0x28] sm:$0xf]
      %v404 = vld [vmem:[#allocation9 + $0x2c] sm:$0xf]
      %v405 = vld [vmem:[#allocation9 + $0x30] sm:$0xf]
      %v406 = vld [vmem:[#allocation9 + $0x34] sm:$0xf]
      %v407 = vld [vmem:[#allocation9 + $0x38] sm:$0xf]
      %v408 = vld [vmem:[#allocation9 + $0x3c] sm:$0xf]
      %v409 = vld [vmem:[%s6] sm:$0x1]
      %v411 = vlaneseq
      %v412 = vshrl.u32 %v411, 7
      %v413 = vsub.s32 0, %v412
      %v414 = vrot.slane %v409, %v413
      %v432 = vunpack.c.l.b16 %v393
      %v433 = vunpack.c.l.b16 %v394
      %v434 = vunpack.c.l.b16 %v395
      %v435 = vunpack.c.l.b16 %v396
      %v436 = vunpack.c.l.b16 %v397
      %v437 = vunpack.c.l.b16 %v398
      %v438 = vunpack.c.l.b16 %v399
      %v439 = vunpack.c.l.b16 %v400
      %v440 = vunpack.c.l.b16 %v401
      %v441 = vunpack.c.l.b16 %v402
      %v442 = vunpack.c.l.b16 %v403
      %v443 = vunpack.c.l.b16 %v404
      %v444 = vunpack.c.l.b16 %v405
      %v445 = vunpack.c.l.b16 %v406
      %v446 = vunpack.c.l.b16 %v407
      %v447 = vunpack.c.l.b16 %v408
      %v448 = vpack.c.b16 %v433, %v432
      %v449 = vpack.c.b16 %v435, %v434
      %v450 = vpack.c.b16 %v437, %v436
      %v451 = vpack.c.b16 %v439, %v438
      %v452 = vpack.c.b16 %v441, %v440
      %v453 = vpack.c.b16 %v443, %v442
      %v454 = vpack.c.b16 %v445, %v444
      %v455 = vpack.c.b16 %v447, %v446
      %464 = vmatprep.subr.bf16.mxu0 0
      %465 = vmatpush1.bf16.msra.mxu0 %v448
      %466 = vmatprep.subr.bf16.mxu0 0
      %467 = vmatpush1.bf16.msra.mxu0 %v449
      %468 = vmatprep.subr.bf16.mxu0 0
      %469 = vmatpush1.bf16.msra.mxu0 %v450
      %470 = vmatprep.subr.bf16.mxu0 0
      %471 = vmatpush1.bf16.msra.mxu0 %v451
      %472 = vmatprep.subr.bf16.mxu0 0
      %473 = vmatpush1.bf16.msra.mxu0 %v452
      %474 = vmatprep.subr.bf16.mxu0 0
      %475 = vmatpush1.bf16.msra.mxu0 %v453
      %476 = vmatprep.subr.bf16.mxu0 0
      %477 = vmatpush1.bf16.msra.mxu0 %v454
      %478 = vmatprep.subr.bf16.mxu0 0
      %479 = vmatpush1.bf16.msra.mxu0 %v455
      %480 = vmatprep.subr.bf16.mxu0 0
      %481 = vmatpush1.bf16.msra.mxu0 0
      %482 = vmatprep.subr.bf16.mxu0 0
      %483 = vmatpush1.bf16.msra.mxu0 0
      %484 = vmatprep.subr.bf16.mxu0 0
      %485 = vmatpush1.bf16.msra.mxu0 0
      %486 = vmatprep.subr.bf16.mxu0 0
      %487 = vmatpush1.bf16.msra.mxu0 0
      %488 = vmatprep.subr.bf16.mxu0 0
      %489 = vmatpush1.bf16.msra.mxu0 0
      %490 = vmatprep.subr.bf16.mxu0 0
      %491 = vmatpush1.bf16.msra.mxu0 0
      %492 = vmatprep.subr.bf16.mxu0 0
      %493 = vmatpush1.bf16.msra.mxu0 0
      %494 = vmatprep.subr.bf16.mxu0 0
      %495 = vmatpush1.bf16.msra.mxu0 0
      %496 = vmatprep.mubr.bf16.mxu0 0
      %497 = vmatmul.mubr.bf16.gmra.mrb[0].mxu0 %v392
      %v498 = vpop.f32.mrb[0].mxu0
      %v499 = vadd.f32 %v414, %v498
      %v500 = vpop.f32.mrb[0].mxu0
      %v501 = vpop.f32.mrb[0].mxu0
      %v502 = vpop.f32.mrb[0].mxu0
      %503 = vdwg.mxu0
      %504 = vmax.xlane.f32.xlu0 %v499
      %v505 = vpop.xlane.xlu0 %504
      %v506 = vsub.f32 %v499, %v505
      %v507 = vmul.f32 %v506, 1.442695
      %v508 = vpow.pop %v507
      %509 = vadd.xlane.f32.xlu0 %v508
      %v510 = vpop.xlane.xlu0 %509
      %v511 = vlog2.pop %v510
      %v512 = vmul.f32 %v511, 0.6931472
      %v513 = vsub.f32 %v506, %v512
      %514 = vst [vmem:[#allocation11] sm:$0xff] %v513
    $region53: #{tpu_custom_call.1} parent=1 // pred_fallthru
      _
    // Predicated region
    $region54: #{tpu_custom_call.1} parent=1 // pred_check
      _
    $region55: #{tpu_custom_call.1} parent=1 // pred_check_branch
      %516 = sbr.rel (0) target = $region57
    $region56: #{tpu_custom_call.1} parent=1 // pred_region
      %s518 = ssub.s32 128, 128
      %519 = vsyncadd [#allocation5], %s518
      %s521 = sshll.u32 [#allocation11], 4
      %s522 = int_to_ptr.vmem [resolvable:$true] %s521
      %524 = dma.vmem_to_hbm [thread:$0]  %s522, 128, %s7, [#allocation5]
    $region57: #{tpu_custom_call.1} parent=1 // pred_fallthru
      _
    // Predicated region
    $region58: #{tpu_custom_call.1} parent=1 // pred_check
      _
    $region59: #{tpu_custom_call.1} parent=1 // pred_check_branch
      %526 = sbr.rel (0) target = $region61
    $region60: #{tpu_custom_call.1} parent=1 // pred_region
      %527 = dma.done [#allocation5], 128
    $region61: #{tpu_custom_call.1} parent=1 // pred_fallthru
      _
    %528 = vsyncpa [#allocation4], 1
    %529 = vsyncpa [#allocation7], 1
    %530 = vsyncpa [#allocation10], 1
    %531 = vsyncpa [#allocation5], 1

</llo_original>
